<compile_context>
chip_gen: v5e
topology: v5e:2x2
jax: 0.10.0
libtpu: 0.0.40
codegen_flags: <defaults>
</compile_context>

<pallas_src>
import jax
import jax.numpy as jnp
from jax.experimental import pallas as pl
from jax.experimental.pallas import tpu as pltpu

HIDDEN = 32          # C.NET.HIDDEN_SIZE (logical feature width)
LN_EPS = 1e-5        # torch.nn.LayerNorm default eps


# ----------------------------- in-kernel helpers -----------------------------

def _row(b_ref, i):
    """Static (1, H) slice of the stacked bias/gamma/beta array."""
    return b_ref[i:i + 1, :]


def _mlp_tail_with_layernorm(x1, b1, w2, b2, w3, b3, gamma, beta):
    """ReLU(x1 + b1) -> Linear -> ReLU -> Linear -> LayerNorm(H).

    Two-pass (centered) variance for numerical robustness.
    """
    h = jnp.maximum(x1 + b1, 0.0)
    h = jnp.maximum(jnp.dot(h, w2, preferred_element_type=jnp.float32) + b2, 0.0)
    h = jnp.dot(h, w3, preferred_element_type=jnp.float32) + b3
    mu = jnp.mean(h, axis=-1, keepdims=True)
    d = h - mu
    var = jnp.mean(d * d, axis=-1, keepdims=True)
    return d * jax.lax.rsqrt(var + LN_EPS) * gamma + beta


# ------------------------------- fused kernel --------------------------------

def fused_kernel(dr_col_ref, recv_row_ref, nodes_ref, edges_ref, w_ref, b_ref,
                 new_nodes_ref, new_edges_ref):
    E = edges_ref.shape[0]
    N = nodes_ref.shape[0]
    nodes = nodes_ref[...]                                        # [N, H]
    edges = edges_ref[...]                                        # [E, H]

    # ---- fused in-kernel gather: one [2E,N] one-hot matmul on the MXU --------
    # rows 0:E   -> nodes[receivers]  (dst)
    # rows E:2E  -> nodes[senders]    (src)
    ids_2en = jax.lax.broadcasted_iota(jnp.int32, (2 * E, N), 1)   # lane = node id
    oh2 = (ids_2en == dr_col_ref[...]).astype(jnp.float32)         # [2E, N]
    gathered = jnp.dot(oh2, nodes, preferred_element_type=jnp.float32)
    dst = gathered[:E]                                             # [E, H]
    src = gathered[E:]                                             # [E, H]

    # ---- edge MLP: Linear(3H->H) as a sum of three HxH matmuls ---------------
    x1 = (jnp.dot(dst, w_ref[0], preferred_element_type=jnp.float32)
          + jnp.dot(src, w_ref[1], preferred_element_type=jnp.float32)
          + jnp.dot(edges, w_ref[2], preferred_element_type=jnp.float32))
    new_edges = _mlp_tail_with_layernorm(
        x1, _row(b_ref, 0), w_ref[3], _row(b_ref, 1), w_ref[4], _row(b_ref, 2),
        _row(b_ref, 3), _row(b_ref, 4))
    new_edges_ref[...] = new_edges

    # ---- scatter_add(receivers) as a native [N,E] @ [E,H] matmul -------------
    ids_ne = jax.lax.broadcasted_iota(jnp.int32, (N, E), 0)        # sublane = node id
    scatter = (ids_ne == recv_row_ref[...]).astype(jnp.float32)    # [N, E]
    effects = jnp.dot(scatter, new_edges, preferred_element_type=jnp.float32)

    # ---- node MLP: Linear(2H->H) as a sum of two HxH matmuls -----------------
    x1n = (jnp.dot(nodes, w_ref[5], preferred_element_type=jnp.float32)
           + jnp.dot(effects, w_ref[6], preferred_element_type=jnp.float32))
    new_nodes_ref[...] = _mlp_tail_with_layernorm(
        x1n, _row(b_ref, 5), w_ref[7], _row(b_ref, 6), w_ref[8], _row(b_ref, 7),
        _row(b_ref, 8), _row(b_ref, 9))


# --------------------------------- wrapper -----------------------------------

_VMEM_SPEC = pl.BlockSpec(memory_space=pltpu.MemorySpace.VMEM)


def pack_params(p):
    """Stack the 9 Linear weights and 10 bias/gamma/beta rows into two arrays so
    the kernel takes 2 parameter operands instead of 19 tiny DMAs."""
    w_stack = jnp.stack([
        p['e_w1_dst'], p['e_w1_src'], p['e_w1_edge'], p['e_w2'], p['e_w3'],
        p['n_w1_nodes'], p['n_w1_eff'], p['n_w2'], p['n_w3']])     # (9, H, H)
    b_stack = jnp.concatenate([
        p['e_b1'], p['e_b2'], p['e_b3'], p['e_ln_g'], p['e_ln_b'],
        p['n_b1'], p['n_b2'], p['n_b3'], p['n_ln_g'], p['n_ln_b']], axis=0)  # (10, H)
    return {'w_stack': w_stack, 'b_stack': b_stack}


@jax.jit
def message_passing_forward(nodes, edges, senders, receivers, packed):
    """Pallas implementation of MessagePassing.forward (single fused kernel).

    Inputs/outputs stay at their natural [N,H]/[E,H] widths: no wrapper-side
    feature padding and no output slicing (4x less HBM I/O vs the padded path).
    The only wrapper-side prep is int32 index shaping (metadata-only bitcasts
    plus a 512 B concat), which is negligible and removes one kernel operand.
    """
    N, H = nodes.shape
    E = edges.shape[0]

    dr_col = jnp.concatenate(
        [receivers.astype(jnp.int32), senders.astype(jnp.int32)], axis=0
    ).reshape(2 * E, 1)                                            # [2E, 1]
    recv_row = receivers.astype(jnp.int32).reshape(1, E)           # lane-dense [1, E]

    new_nodes, new_edges = pl.pallas_call(
        fused_kernel,
        out_shape=(jax.ShapeDtypeStruct((N, H), jnp.float32),
                   jax.ShapeDtypeStruct((E, H), jnp.float32)),
        in_specs=[_VMEM_SPEC] * 6,
        out_specs=(_VMEM_SPEC, _VMEM_SPEC),
    )(dr_col, recv_row, nodes, edges, packed['w_stack'], packed['b_stack'])

    return new_nodes, new_edges


# ------------------------------ pure-JAX reference ----------------------------

def _ref_mlp(x, w1, b1, w2, b2, w3, b3, g, beta):
    h = jnp.maximum(x @ w1 + b1, 0.0)
    h = jnp.maximum(h @ w2 + b2, 0.0)
    h = h @ w3 + b3
    mu = jnp.mean(h, axis=-1, keepdims=True)
    var = jnp.mean((h - mu) ** 2, axis=-1, keepdims=True)
    return (h - mu) / jnp.sqrt(var + LN_EPS) * g + beta


def message_passing_reference(nodes, edges, senders, receivers, p):
    src = nodes[senders]
    dst = nodes[receivers]
    e_w1 = jnp.concatenate([p['e_w1_dst'], p['e_w1_src'], p['e_w1_edge']], axis=0)
    new_edges = _ref_mlp(jnp.concatenate([dst, src, edges], axis=1),
                         e_w1, p['e_b1'], p['e_w2'], p['e_b2'],
                         p['e_w3'], p['e_b3'], p['e_ln_g'], p['e_ln_b'])
    effects = jnp.zeros_like(nodes).at[receivers].add(new_edges)
    n_w1 = jnp.concatenate([p['n_w1_nodes'], p['n_w1_eff']], axis=0)
    new_nodes = _ref_mlp(jnp.concatenate([nodes, effects], axis=1),
                         n_w1, p['n_b1'], p['n_w2'], p['n_b2'],
                         p['n_w3'], p['n_b3'], p['n_ln_g'], p['n_ln_b'])
    return new_nodes, new_edges


# -------------------------------- param init ---------------------------------

def init_params(key, hidden):
    def linear(k, fan_in, fan_out):
        kw, kb = jax.random.split(k)
        bound = 1.0 / jnp.sqrt(fan_in)
        w = jax.random.uniform(kw, (fan_in, fan_out), jnp.float32, -bound, bound)
        b = jax.random.uniform(kb, (1, fan_out), jnp.float32, -bound, bound)
        return w, b

    ks = jax.random.split(key, 6)
    # edge_model: Linear(3H->H), Linear(H->H), Linear(H->H), LayerNorm(H)
    e_w1, e_b1 = linear(ks[0], 3 * hidden, hidden)
    e_w2, e_b2 = linear(ks[1], hidden, hidden)
    e_w3, e_b3 = linear(ks[2], hidden, hidden)
    # node_model: Linear(2H->H), Linear(H->H), Linear(H->H), LayerNorm(H)
    n_w1, n_b1 = linear(ks[3], 2 * hidden, hidden)
    n_w2, n_b2 = linear(ks[4], hidden, hidden)
    n_w3, n_b3 = linear(ks[5], hidden, hidden)

    return {
        'e_w1_dst': e_w1[:hidden], 'e_w1_src': e_w1[hidden:2 * hidden],
        'e_w1_edge': e_w1[2 * hidden:], 'e_b1': e_b1,
        'e_w2': e_w2, 'e_b2': e_b2, 'e_w3': e_w3, 'e_b3': e_b3,
        'e_ln_g': jnp.ones((1, hidden), jnp.float32),
        'e_ln_b': jnp.zeros((1, hidden), jnp.float32),
        'n_w1_nodes': n_w1[:hidden], 'n_w1_eff': n_w1[hidden:], 'n_b1': n_b1,
        'n_w2': n_w2, 'n_b2': n_b2, 'n_w3': n_w3, 'n_b3': n_b3,
        'n_ln_g': jnp.ones((1, hidden), jnp.float32),
        'n_ln_b': jnp.zeros((1, hidden), jnp.float32),
    }


# ----------------------------------- main -------------------------------------

if __name__ == "__main__":
    key = jax.random.PRNGKey(0)
    k_nodes, k_edges, k_send, k_recv, k_params = jax.random.split(key, 5)

    N, E, H = 16, 64, HIDDEN
    nodes = jax.random.normal(k_nodes, (N, H), jnp.float32)
    edges = jax.random.normal(k_edges, (E, H), jnp.float32)
    senders = jax.random.randint(k_send, (E,), 0, N, jnp.int32)
    receivers = jax.random.randint(k_recv, (E,), 0, N, jnp.int32)
    params = init_params(k_params, H)
    packed = jax.block_until_ready(pack_params(params))   # one-time packing

    new_nodes, new_edges = jax.block_until_ready(
        message_passing_forward(nodes, edges, senders, receivers, packed))

    ref_nodes, ref_edges = message_passing_reference(
        nodes, edges, senders, receivers, params)

    assert new_nodes.shape == (N, H) and new_edges.shape == (E, H)
    assert jnp.allclose(new_edges, ref_edges, atol=1e-4, rtol=1e-4)
    assert jnp.allclose(new_nodes, ref_nodes, atol=1e-4, rtol=1e-4)

    print("KERNEL_OK")
</pallas_src>

<mosaic_0001>
module attributes {stable_mosaic.version = 11 : i64} {
  func.func @fused_kernel(%arg0: memref<128x1xi32, #tpu.memory_space<vmem>>, %arg1: memref<1x64xi32, #tpu.memory_space<vmem>>, %arg2: memref<16x32xf32, #tpu.memory_space<vmem>>, %arg3: memref<64x32xf32, #tpu.memory_space<vmem>>, %arg4: memref<9x32x32xf32, #tpu.memory_space<vmem>>, %arg5: memref<10x32xf32, #tpu.memory_space<vmem>>, %arg6: memref<16x32xf32, #tpu.memory_space<vmem>>, %arg7: memref<64x32xf32, #tpu.memory_space<vmem>>) attributes {dimension_semantics = [], scalar_prefetch = 0 : i64, scratch_operands = 0 : i64, tpu.core_type = #tpu.core_type<tc>} {
    %c0 = arith.constant 0 : index
    %c0_0 = arith.constant 0 : index
    %0 = vector.load %arg2[%c0, %c0_0] : memref<16x32xf32, #tpu.memory_space<vmem>>, vector<16x32xf32>
    %c0_1 = arith.constant 0 : index
    %c0_2 = arith.constant 0 : index
    %1 = vector.load %arg3[%c0_1, %c0_2] : memref<64x32xf32, #tpu.memory_space<vmem>>, vector<64x32xf32>
    %2 = tpu.iota {dimensions = array<i32: 1>} : vector<128x16xi32>
    %c0_3 = arith.constant 0 : index
    %c0_4 = arith.constant 0 : index
    %3 = vector.load %arg0[%c0_3, %c0_4] : memref<128x1xi32, #tpu.memory_space<vmem>>, vector<128x1xi32>
    %4 = vector.broadcast %3 : vector<128x1xi32> to vector<128x16xi32>
    %5 = arith.cmpi eq, %2, %4 : vector<128x16xi32>
    %6 = arith.extui %5 : vector<128x16xi1> to vector<128x16xi32>
    %7 = arith.sitofp %6 : vector<128x16xi32> to vector<128x16xf32>
    %cst = arith.constant dense<0.000000e+00> : vector<128x32xf32>
    %8 = tpu.matmul %7, %0, %cst {dimension_numbers = #tpu.dot_dimension_numbers<[1], [0], [0], [1], [0, 0, 1, 1], [], []>} : vector<128x16xf32>, vector<16x32xf32>, vector<128x32xf32> -> vector<128x32xf32>
    %9 = vector.extract_strided_slice %8 {offsets = [0, 0], sizes = [64, 32], strides = [1, 1]} : vector<128x32xf32> to vector<64x32xf32>
    %10 = vector.extract_strided_slice %8 {offsets = [64, 0], sizes = [64, 32], strides = [1, 1]} : vector<128x32xf32> to vector<64x32xf32>
    %c0_5 = arith.constant 0 : index
    %c0_6 = arith.constant 0 : index
    %c0_7 = arith.constant 0 : index
    %11 = vector.load %arg4[%c0_5, %c0_6, %c0_7] : memref<9x32x32xf32, #tpu.memory_space<vmem>>, vector<1x32x32xf32>
    %12 = vector.shape_cast %11 : vector<1x32x32xf32> to vector<32x32xf32>
    %cst_8 = arith.constant dense<0.000000e+00> : vector<64x32xf32>
    %13 = tpu.matmul %9, %12, %cst_8 {dimension_numbers = #tpu.dot_dimension_numbers<[1], [0], [0], [1], [0, 0, 1, 1], [], []>} : vector<64x32xf32>, vector<32x32xf32>, vector<64x32xf32> -> vector<64x32xf32>
    %c1 = arith.constant 1 : index
    %c0_9 = arith.constant 0 : index
    %c0_10 = arith.constant 0 : index
    %14 = vector.load %arg4[%c1, %c0_9, %c0_10] : memref<9x32x32xf32, #tpu.memory_space<vmem>>, vector<1x32x32xf32>
    %15 = vector.shape_cast %14 : vector<1x32x32xf32> to vector<32x32xf32>
    %cst_11 = arith.constant dense<0.000000e+00> : vector<64x32xf32>
    %16 = tpu.matmul %10, %15, %cst_11 {dimension_numbers = #tpu.dot_dimension_numbers<[1], [0], [0], [1], [0, 0, 1, 1], [], []>} : vector<64x32xf32>, vector<32x32xf32>, vector<64x32xf32> -> vector<64x32xf32>
    %17 = arith.addf %13, %16 : vector<64x32xf32>
    %c2 = arith.constant 2 : index
    %c0_12 = arith.constant 0 : index
    %c0_13 = arith.constant 0 : index
    %18 = vector.load %arg4[%c2, %c0_12, %c0_13] : memref<9x32x32xf32, #tpu.memory_space<vmem>>, vector<1x32x32xf32>
    %19 = vector.shape_cast %18 : vector<1x32x32xf32> to vector<32x32xf32>
    %cst_14 = arith.constant dense<0.000000e+00> : vector<64x32xf32>
    %20 = tpu.matmul %1, %19, %cst_14 {dimension_numbers = #tpu.dot_dimension_numbers<[1], [0], [0], [1], [0, 0, 1, 1], [], []>} : vector<64x32xf32>, vector<32x32xf32>, vector<64x32xf32> -> vector<64x32xf32>
    %21 = arith.addf %17, %20 : vector<64x32xf32>
    %c0_15 = arith.constant 0 : index
    %c0_16 = arith.constant 0 : index
    %22 = vector.load %arg5[%c0_15, %c0_16] : memref<10x32xf32, #tpu.memory_space<vmem>>, vector<1x32xf32>
    %c3 = arith.constant 3 : index
    %c0_17 = arith.constant 0 : index
    %c0_18 = arith.constant 0 : index
    %23 = vector.load %arg4[%c3, %c0_17, %c0_18] : memref<9x32x32xf32, #tpu.memory_space<vmem>>, vector<1x32x32xf32>
    %24 = vector.shape_cast %23 : vector<1x32x32xf32> to vector<32x32xf32>
    %c1_19 = arith.constant 1 : index
    %c0_20 = arith.constant 0 : index
    %25 = vector.load %arg5[%c1_19, %c0_20] : memref<10x32xf32, #tpu.memory_space<vmem>>, vector<1x32xf32>
    %c4 = arith.constant 4 : index
    %c0_21 = arith.constant 0 : index
    %c0_22 = arith.constant 0 : index
    %26 = vector.load %arg4[%c4, %c0_21, %c0_22] : memref<9x32x32xf32, #tpu.memory_space<vmem>>, vector<1x32x32xf32>
    %27 = vector.shape_cast %26 : vector<1x32x32xf32> to vector<32x32xf32>
    %c2_23 = arith.constant 2 : index
    %c0_24 = arith.constant 0 : index
    %28 = vector.load %arg5[%c2_23, %c0_24] : memref<10x32xf32, #tpu.memory_space<vmem>>, vector<1x32xf32>
    %c3_25 = arith.constant 3 : index
    %c0_26 = arith.constant 0 : index
    %29 = vector.load %arg5[%c3_25, %c0_26] : memref<10x32xf32, #tpu.memory_space<vmem>>, vector<1x32xf32>
    %c4_27 = arith.constant 4 : index
    %c0_28 = arith.constant 0 : index
    %30 = vector.load %arg5[%c4_27, %c0_28] : memref<10x32xf32, #tpu.memory_space<vmem>>, vector<1x32xf32>
    %31 = vector.broadcast %22 : vector<1x32xf32> to vector<64x32xf32>
    %32 = arith.addf %21, %31 : vector<64x32xf32>
    %cst_29 = arith.constant 0.000000e+00 : f32
    %33 = vector.broadcast %cst_29 : f32 to vector<64x32xf32>
    %34 = arith.maximumf %32, %33 : vector<64x32xf32>
    %cst_30 = arith.constant dense<0.000000e+00> : vector<64x32xf32>
    %35 = tpu.matmul %34, %24, %cst_30 {dimension_numbers = #tpu.dot_dimension_numbers<[1], [0], [0], [1], [0, 0, 1, 1], [], []>} : vector<64x32xf32>, vector<32x32xf32>, vector<64x32xf32> -> vector<64x32xf32>
    %36 = vector.broadcast %25 : vector<1x32xf32> to vector<64x32xf32>
    %37 = arith.addf %35, %36 : vector<64x32xf32>
    %cst_31 = arith.constant 0.000000e+00 : f32
    %38 = vector.broadcast %cst_31 : f32 to vector<64x32xf32>
    %39 = arith.maximumf %37, %38 : vector<64x32xf32>
    %cst_32 = arith.constant dense<0.000000e+00> : vector<64x32xf32>
    %40 = tpu.matmul %39, %27, %cst_32 {dimension_numbers = #tpu.dot_dimension_numbers<[1], [0], [0], [1], [0, 0, 1, 1], [], []>} : vector<64x32xf32>, vector<32x32xf32>, vector<64x32xf32> -> vector<64x32xf32>
    %41 = vector.broadcast %28 : vector<1x32xf32> to vector<64x32xf32>
    %42 = arith.addf %40, %41 : vector<64x32xf32>
    %cst_33 = arith.constant dense<0.000000e+00> : vector<64xf32>
    %43 = vector.multi_reduction <add>, %42, %cst_33 [1] : vector<64x32xf32> to vector<64xf32>
    %44 = vector.shape_cast %43 : vector<64xf32> to vector<64x1xf32>
    %cst_34 = arith.constant 3.200000e+01 : f32
    %45 = vector.broadcast %cst_34 : f32 to vector<64x1xf32>
    %46 = arith.divf %44, %45 : vector<64x1xf32>
    %47 = vector.broadcast %46 : vector<64x1xf32> to vector<64x32xf32>
    %48 = arith.subf %42, %47 : vector<64x32xf32>
    %49 = arith.mulf %48, %48 : vector<64x32xf32>
    %cst_35 = arith.constant dense<0.000000e+00> : vector<64xf32>
    %50 = vector.multi_reduction <add>, %49, %cst_35 [1] : vector<64x32xf32> to vector<64xf32>
    %51 = vector.shape_cast %50 : vector<64xf32> to vector<64x1xf32>
    %cst_36 = arith.constant 3.200000e+01 : f32
    %52 = vector.broadcast %cst_36 : f32 to vector<64x1xf32>
    %53 = arith.divf %51, %52 : vector<64x1xf32>
    %cst_37 = arith.constant 9.99999974E-6 : f32
    %54 = vector.broadcast %cst_37 : f32 to vector<64x1xf32>
    %55 = arith.addf %53, %54 : vector<64x1xf32>
    %56 = math.rsqrt %55 : vector<64x1xf32>
    %57 = vector.broadcast %56 : vector<64x1xf32> to vector<64x32xf32>
    %58 = arith.mulf %48, %57 : vector<64x32xf32>
    %59 = vector.broadcast %29 : vector<1x32xf32> to vector<64x32xf32>
    %60 = arith.mulf %58, %59 : vector<64x32xf32>
    %61 = vector.broadcast %30 : vector<1x32xf32> to vector<64x32xf32>
    %62 = arith.addf %60, %61 : vector<64x32xf32>
    %c0_38 = arith.constant 0 : index
    %c0_39 = arith.constant 0 : index
    %63 = vector.load %arg7[%c0_38, %c0_39] : memref<64x32xf32, #tpu.memory_space<vmem>>, vector<64x32xf32>
    tpu.vector_store %arg7[%c0_38, %c0_39], %62 {strides = array<i32>} : memref<64x32xf32, #tpu.memory_space<vmem>>, vector<64x32xf32>,
    %64 = tpu.iota {dimensions = array<i32: 0>} : vector<16x64xi32>
    %c0_40 = arith.constant 0 : index
    %c0_41 = arith.constant 0 : index
    %65 = vector.load %arg1[%c0_40, %c0_41] : memref<1x64xi32, #tpu.memory_space<vmem>>, vector<1x64xi32>
    %66 = vector.broadcast %65 : vector<1x64xi32> to vector<16x64xi32>
    %67 = arith.cmpi eq, %64, %66 : vector<16x64xi32>
    %68 = arith.extui %67 : vector<16x64xi1> to vector<16x64xi32>
    %69 = arith.sitofp %68 : vector<16x64xi32> to vector<16x64xf32>
    %cst_42 = arith.constant dense<0.000000e+00> : vector<16x32xf32>
    %70 = tpu.matmul %69, %62, %cst_42 {dimension_numbers = #tpu.dot_dimension_numbers<[1], [0], [0], [1], [0, 0, 1, 1], [], []>} : vector<16x64xf32>, vector<64x32xf32>, vector<16x32xf32> -> vector<16x32xf32>
    %c5 = arith.constant 5 : index
    %c0_43 = arith.constant 0 : index
    %c0_44 = arith.constant 0 : index
    %71 = vector.load %arg4[%c5, %c0_43, %c0_44] : memref<9x32x32xf32, #tpu.memory_space<vmem>>, vector<1x32x32xf32>
    %72 = vector.shape_cast %71 : vector<1x32x32xf32> to vector<32x32xf32>
    %cst_45 = arith.constant dense<0.000000e+00> : vector<16x32xf32>
    %73 = tpu.matmul %0, %72, %cst_45 {dimension_numbers = #tpu.dot_dimension_numbers<[1], [0], [0], [1], [0, 0, 1, 1], [], []>} : vector<16x32xf32>, vector<32x32xf32>, vector<16x32xf32> -> vector<16x32xf32>
    %c6 = arith.constant 6 : index
    %c0_46 = arith.constant 0 : index
    %c0_47 = arith.constant 0 : index
    %74 = vector.load %arg4[%c6, %c0_46, %c0_47] : memref<9x32x32xf32, #tpu.memory_space<vmem>>, vector<1x32x32xf32>
    %75 = vector.shape_cast %74 : vector<1x32x32xf32> to vector<32x32xf32>
    %cst_48 = arith.constant dense<0.000000e+00> : vector<16x32xf32>
    %76 = tpu.matmul %70, %75, %cst_48 {dimension_numbers = #tpu.dot_dimension_numbers<[1], [0], [0], [1], [0, 0, 1, 1], [], []>} : vector<16x32xf32>, vector<32x32xf32>, vector<16x32xf32> -> vector<16x32xf32>
    %77 = arith.addf %73, %76 : vector<16x32xf32>
    %c5_49 = arith.constant 5 : index
    %c0_50 = arith.constant 0 : index
    %78 = vector.load %arg5[%c5_49, %c0_50] : memref<10x32xf32, #tpu.memory_space<vmem>>, vector<1x32xf32>
    %c7 = arith.constant 7 : index
    %c0_51 = arith.constant 0 : index
    %c0_52 = arith.constant 0 : index
    %79 = vector.load %arg4[%c7, %c0_51, %c0_52] : memref<9x32x32xf32, #tpu.memory_space<vmem>>, vector<1x32x32xf32>
    %80 = vector.shape_cast %79 : vector<1x32x32xf32> to vector<32x32xf32>
    %c6_53 = arith.constant 6 : index
    %c0_54 = arith.constant 0 : index
    %81 = vector.load %arg5[%c6_53, %c0_54] : memref<10x32xf32, #tpu.memory_space<vmem>>, vector<1x32xf32>
    %c8 = arith.constant 8 : index
    %c0_55 = arith.constant 0 : index
    %c0_56 = arith.constant 0 : index
    %82 = vector.load %arg4[%c8, %c0_55, %c0_56] : memref<9x32x32xf32, #tpu.memory_space<vmem>>, vector<1x32x32xf32>
    %83 = vector.shape_cast %82 : vector<1x32x32xf32> to vector<32x32xf32>
    %c7_57 = arith.constant 7 : index
    %c0_58 = arith.constant 0 : index
    %84 = vector.load %arg5[%c7_57, %c0_58] : memref<10x32xf32, #tpu.memory_space<vmem>>, vector<1x32xf32>
    %c8_59 = arith.constant 8 : index
    %c0_60 = arith.constant 0 : index
    %85 = vector.load %arg5[%c8_59, %c0_60] : memref<10x32xf32, #tpu.memory_space<vmem>>, vector<1x32xf32>
    %c9 = arith.constant 9 : index
    %c0_61 = arith.constant 0 : index
    %86 = vector.load %arg5[%c9, %c0_61] : memref<10x32xf32, #tpu.memory_space<vmem>>, vector<1x32xf32>
    %87 = vector.broadcast %78 : vector<1x32xf32> to vector<16x32xf32>
    %88 = arith.addf %77, %87 : vector<16x32xf32>
    %cst_62 = arith.constant 0.000000e+00 : f32
    %89 = vector.broadcast %cst_62 : f32 to vector<16x32xf32>
    %90 = arith.maximumf %88, %89 : vector<16x32xf32>
    %cst_63 = arith.constant dense<0.000000e+00> : vector<16x32xf32>
    %91 = tpu.matmul %90, %80, %cst_63 {dimension_numbers = #tpu.dot_dimension_numbers<[1], [0], [0], [1], [0, 0, 1, 1], [], []>} : vector<16x32xf32>, vector<32x32xf32>, vector<16x32xf32> -> vector<16x32xf32>
    %92 = vector.broadcast %81 : vector<1x32xf32> to vector<16x32xf32>
    %93 = arith.addf %91, %92 : vector<16x32xf32>
    %cst_64 = arith.constant 0.000000e+00 : f32
    %94 = vector.broadcast %cst_64 : f32 to vector<16x32xf32>
    %95 = arith.maximumf %93, %94 : vector<16x32xf32>
    %cst_65 = arith.constant dense<0.000000e+00> : vector<16x32xf32>
    %96 = tpu.matmul %95, %83, %cst_65 {dimension_numbers = #tpu.dot_dimension_numbers<[1], [0], [0], [1], [0, 0, 1, 1], [], []>} : vector<16x32xf32>, vector<32x32xf32>, vector<16x32xf32> -> vector<16x32xf32>
    %97 = vector.broadcast %84 : vector<1x32xf32> to vector<16x32xf32>
    %98 = arith.addf %96, %97 : vector<16x32xf32>
    %cst_66 = arith.constant dense<0.000000e+00> : vector<16xf32>
    %99 = vector.multi_reduction <add>, %98, %cst_66 [1] : vector<16x32xf32> to vector<16xf32>
    %100 = vector.shape_cast %99 : vector<16xf32> to vector<16x1xf32>
    %cst_67 = arith.constant 3.200000e+01 : f32
    %101 = vector.broadcast %cst_67 : f32 to vector<16x1xf32>
    %102 = arith.divf %100, %101 : vector<16x1xf32>
    %103 = vector.broadcast %102 : vector<16x1xf32> to vector<16x32xf32>
    %104 = arith.subf %98, %103 : vector<16x32xf32>
    %105 = arith.mulf %104, %104 : vector<16x32xf32>
    %cst_68 = arith.constant dense<0.000000e+00> : vector<16xf32>
    %106 = vector.multi_reduction <add>, %105, %cst_68 [1] : vector<16x32xf32> to vector<16xf32>
    %107 = vector.shape_cast %106 : vector<16xf32> to vector<16x1xf32>
    %cst_69 = arith.constant 3.200000e+01 : f32
    %108 = vector.broadcast %cst_69 : f32 to vector<16x1xf32>
    %109 = arith.divf %107, %108 : vector<16x1xf32>
    %cst_70 = arith.constant 9.99999974E-6 : f32
    %110 = vector.broadcast %cst_70 : f32 to vector<16x1xf32>
    %111 = arith.addf %109, %110 : vector<16x1xf32>
    %112 = math.rsqrt %111 : vector<16x1xf32>
    %113 = vector.broadcast %112 : vector<16x1xf32> to vector<16x32xf32>
    %114 = arith.mulf %104, %113 : vector<16x32xf32>
    %115 = vector.broadcast %85 : vector<1x32xf32> to vector<16x32xf32>
    %116 = arith.mulf %114, %115 : vector<16x32xf32>
    %117 = vector.broadcast %86 : vector<1x32xf32> to vector<16x32xf32>
    %118 = arith.addf %116, %117 : vector<16x32xf32>
    %c0_71 = arith.constant 0 : index
    %c0_72 = arith.constant 0 : index
    %119 = vector.load %arg6[%c0_71, %c0_72] : memref<16x32xf32, #tpu.memory_space<vmem>>, vector<16x32xf32>
    tpu.vector_store %arg6[%c0_71, %c0_72], %118 {strides = array<i32>} : memref<16x32xf32, #tpu.memory_space<vmem>>, vector<16x32xf32>,
    return
  }
}

</mosaic_0001>

<llo_original>
// kernel: message_passing_forward.1
$region0: #{message_passing_forward.1}
  #allocation0 [shape = 'u32[]', space=smem, size = 0x4, offset = 0x4, fixed_abs, tag = 'smem constant byte address 0x4 - core index']
  #allocation1 [shape = 'u32[72,128]{1,0:T(1,128)}', space=vmem, size = 0x9000, scoped, tag = 'internal scratch']
  %s0 = inlined_call_operand.vmem [shape: s32[128,1], index: 0, kind: input, shape index: {}]
  %s1 = inlined_call_operand.vmem [shape: s32[1,64], index: 1, kind: input, shape index: {}]
  %s2 = inlined_call_operand.vmem [shape: f32[16,32], index: 2, kind: input, shape index: {}]
  %s3 = inlined_call_operand.vmem [shape: f32[64,32], index: 3, kind: input, shape index: {}]
  %s4 = inlined_call_operand.hbm [shape: f32[9,32,32], index: 4, kind: input, shape index: {}]
  %s5 = inlined_call_operand.vmem [shape: f32[10,32], index: 5, kind: input, shape index: {}]
  %s6 = inlined_call_operand.hbm [shape: f32[16,32], index: 6, kind: output, shape index: {0}]
  %s7 = inlined_call_operand.vmem [shape: f32[64,32], index: 7, kind: output, shape index: {1}]
  %8 = xla_tuple %s6, %s7
  %s9 = sld [smem:[#allocation0]]
  $region46: #{message_passing_forward.1} parent=0
    _
  %s11 = ssub.s32 1, %s9
  %s12 = scalar_select 0, %s11, %s9
  $region1: #{message_passing_forward.1} parent=0
    #allocation2 [shape = 'u8[147456]{0}', space=vmem, size = 0x24000, scoped, tag = 'input window, operand 4, single buffered']
    #allocation3 [shape = 's32[1]{0}', space=sflag, size = 0x4, scoped, tag = 'scoped memory for message_passing_forward.1']
    #allocation4 [shape = 's32[1]{0}', space=sflag, size = 0x4, scoped, tag = 'scoped memory for message_passing_forward.1']
    #allocation5 [shape = 'u8[8192]{0}', space=vmem, size = 0x2000, scoped, tag = 'output window, operand 0, single buffered']
    %13 = vsyncpa [#allocation3], 0
    %14 = vsyncpa [#allocation4], 0
    // Predicated region
    $region2: #{message_passing_forward.1} parent=1 // pred_check
      _
    $region3: #{message_passing_forward.1} parent=1 // pred_check_branch
      %16 = sbr.rel (0) target = $region5
    $region4: #{message_passing_forward.1} parent=1 // pred_region
      _
    $region5: #{message_passing_forward.1} parent=1 // pred_fallthru
      _
    // Predicated region
    $region6: #{message_passing_forward.1} parent=1 // pred_check
      _
    $region7: #{message_passing_forward.1} parent=1 // pred_check_branch
      %18 = sbr.rel (0) target = $region9
    $region8: #{message_passing_forward.1} parent=1 // pred_region
      _
    $region9: #{message_passing_forward.1} parent=1 // pred_fallthru
      _
    // Predicated region
    $region10: #{message_passing_forward.1} parent=1 // pred_check
      _
    $region11: #{message_passing_forward.1} parent=1 // pred_check_branch
      %20 = sbr.rel (0) target = $region13
    $region12: #{message_passing_forward.1} parent=1 // pred_region
      _
    $region13: #{message_passing_forward.1} parent=1 // pred_fallthru
      _
    // Predicated region
    $region14: #{message_passing_forward.1} parent=1 // pred_check
      _
    $region15: #{message_passing_forward.1} parent=1 // pred_check_branch
      %22 = sbr.rel (0) target = $region17
    $region16: #{message_passing_forward.1} parent=1 // pred_region
      _
    $region17: #{message_passing_forward.1} parent=1 // pred_fallthru
      _
    // Predicated region
    $region18: #{message_passing_forward.1} parent=1 // pred_check
      _
    $region19: #{message_passing_forward.1} parent=1 // pred_check_branch
      %24 = sbr.rel (0) target = $region21
    $region20: #{message_passing_forward.1} parent=1 // pred_region
      %26 = vsyncadd [#allocation3], 0
      %s27 = sshll.u32 %s4, 4
      %s28 = int_to_ptr.hbm [resolvable:$true] %s27
      %s29 = sshll.u32 [#allocation2], 4
      %s30 = int_to_ptr.vmem [resolvable:$true] %s29
      %35 = dma.hbm_to_vmem [thread:$0]  %s28, 4608, %s30, [#allocation3], 128, 128, 8
    $region21: #{message_passing_forward.1} parent=1 // pred_fallthru
      _
    // Predicated region
    $region22: #{message_passing_forward.1} parent=1 // pred_check
      _
    $region23: #{message_passing_forward.1} parent=1 // pred_check_branch
      %37 = sbr.rel (0) target = $region25
    $region24: #{message_passing_forward.1} parent=1 // pred_region
      _
    $region25: #{message_passing_forward.1} parent=1 // pred_fallthru
      _
    // Predicated region
    $region26: #{message_passing_forward.1} parent=1 // pred_check
      _
    $region27: #{message_passing_forward.1} parent=1 // pred_check_branch
      %39 = sbr.rel (0) target = $region29
    $region28: #{message_passing_forward.1} parent=1 // pred_region
      %41 = dma.done [#allocation3], 4608
    $region29: #{message_passing_forward.1} parent=1 // pred_fallthru
      _
    %v42 = vld [vmem:[%s2] sm:$0xff]
    %v43 = vld [vmem:[%s2 + $0x8] sm:$0xff]
    %v44 = vld [vmem:[%s3] sm:$0xff]
    %v45 = vld [vmem:[%s3 + $0x8] sm:$0xff]
    %v46 = vld [vmem:[%s3 + $0x10] sm:$0xff]
    %v47 = vld [vmem:[%s3 + $0x18] sm:$0xff]
    %v48 = vld [vmem:[%s3 + $0x20] sm:$0xff]
    %v49 = vld [vmem:[%s3 + $0x28] sm:$0xff]
    %v50 = vld [vmem:[%s3 + $0x30] sm:$0xff]
    %v51 = vld [vmem:[%s3 + $0x38] sm:$0xff]
    %v52 = vlaneseq
    %v53 = vand.u32 %v52, 127
    %v54 = vld [vmem:[%s0] sm:$0xff]
    %v55 = vld [vmem:[%s0 + $0x8] sm:$0xff]
    %v56 = vld [vmem:[%s0 + $0x10] sm:$0xff]
    %v57 = vld [vmem:[%s0 + $0x18] sm:$0xff]
    %v58 = vld [vmem:[%s0 + $0x20] sm:$0xff]
    %v59 = vld [vmem:[%s0 + $0x28] sm:$0xff]
    %v60 = vld [vmem:[%s0 + $0x30] sm:$0xff]
    %v61 = vld [vmem:[%s0 + $0x38] sm:$0xff]
    %v62 = vld [vmem:[%s0 + $0x40] sm:$0xff]
    %v63 = vld [vmem:[%s0 + $0x48] sm:$0xff]
    %v64 = vld [vmem:[%s0 + $0x50] sm:$0xff]
    %v65 = vld [vmem:[%s0 + $0x58] sm:$0xff]
    %v66 = vld [vmem:[%s0 + $0x60] sm:$0xff]
    %v67 = vld [vmem:[%s0 + $0x68] sm:$0xff]
    %v68 = vld [vmem:[%s0 + $0x70] sm:$0xff]
    %v69 = vld [vmem:[%s0 + $0x78] sm:$0xff]
    %70 = vset.pattern.permute.xlu0 0
    %71 = vperm.xlu0 %70, %v54
    %v72 = vpop.permute.xlu0 %71
    %73 = vset.pattern.permute.xlu0 0
    %74 = vperm.xlu0 %73, %v55
    %v75 = vpop.permute.xlu0 %74
    %76 = vset.pattern.permute.xlu0 0
    %77 = vperm.xlu0 %76, %v56
    %v78 = vpop.permute.xlu0 %77
    %79 = vset.pattern.permute.xlu0 0
    %80 = vperm.xlu0 %79, %v57
    %v81 = vpop.permute.xlu0 %80
    %82 = vset.pattern.permute.xlu0 0
    %83 = vperm.xlu0 %82, %v58
    %v84 = vpop.permute.xlu0 %83
    %85 = vset.pattern.permute.xlu0 0
    %86 = vperm.xlu0 %85, %v59
    %v87 = vpop.permute.xlu0 %86
    %88 = vset.pattern.permute.xlu0 0
    %89 = vperm.xlu0 %88, %v60
    %v90 = vpop.permute.xlu0 %89
    %91 = vset.pattern.permute.xlu0 0
    %92 = vperm.xlu0 %91, %v61
    %v93 = vpop.permute.xlu0 %92
    %94 = vset.pattern.permute.xlu0 0
    %95 = vperm.xlu0 %94, %v62
    %v96 = vpop.permute.xlu0 %95
    %97 = vset.pattern.permute.xlu0 0
    %98 = vperm.xlu0 %97, %v63
    %v99 = vpop.permute.xlu0 %98
    %100 = vset.pattern.permute.xlu0 0
    %101 = vperm.xlu0 %100, %v64
    %v102 = vpop.permute.xlu0 %101
    %103 = vset.pattern.permute.xlu0 0
    %104 = vperm.xlu0 %103, %v65
    %v105 = vpop.permute.xlu0 %104
    %106 = vset.pattern.permute.xlu0 0
    %107 = vperm.xlu0 %106, %v66
    %v108 = vpop.permute.xlu0 %107
    %109 = vset.pattern.permute.xlu0 0
    %110 = vperm.xlu0 %109, %v67
    %v111 = vpop.permute.xlu0 %110
    %112 = vset.pattern.permute.xlu0 0
    %113 = vperm.xlu0 %112, %v68
    %v114 = vpop.permute.xlu0 %113
    %115 = vset.pattern.permute.xlu0 0
    %116 = vperm.xlu0 %115, %v69
    %v117 = vpop.permute.xlu0 %116
    %vm118 = vcmp.eq.s32.totalorder %v53, %v72
    %vm119 = vcmp.eq.s32.totalorder %v53, %v75
    %vm120 = vcmp.eq.s32.totalorder %v53, %v78
    %vm121 = vcmp.eq.s32.totalorder %v53, %v81
    %vm122 = vcmp.eq.s32.totalorder %v53, %v84
    %vm123 = vcmp.eq.s32.totalorder %v53, %v87
    %vm124 = vcmp.eq.s32.totalorder %v53, %v90
    %vm125 = vcmp.eq.s32.totalorder %v53, %v93
    %vm126 = vcmp.eq.s32.totalorder %v53, %v96
    %vm127 = vcmp.eq.s32.totalorder %v53, %v99
    %vm128 = vcmp.eq.s32.totalorder %v53, %v102
    %vm129 = vcmp.eq.s32.totalorder %v53, %v105
    %vm130 = vcmp.eq.s32.totalorder %v53, %v108
    %vm131 = vcmp.eq.s32.totalorder %v53, %v111
    %vm132 = vcmp.eq.s32.totalorder %v53, %v114
    %vm133 = vcmp.eq.s32.totalorder %v53, %v117
    %v134 = vsel %vm118, 1, 0
    %v135 = vsel %vm119, 1, 0
    %v136 = vsel %vm120, 1, 0
    %v137 = vsel %vm121, 1, 0
    %v138 = vsel %vm122, 1, 0
    %v139 = vsel %vm123, 1, 0
    %v140 = vsel %vm124, 1, 0
    %v141 = vsel %vm125, 1, 0
    %v142 = vsel %vm126, 1, 0
    %v143 = vsel %vm127, 1, 0
    %v144 = vsel %vm128, 1, 0
    %v145 = vsel %vm129, 1, 0
    %v146 = vsel %vm130, 1, 0
    %v147 = vsel %vm131, 1, 0
    %v148 = vsel %vm132, 1, 0
    %v149 = vsel %vm133, 1, 0
    %v150 = vcvt.s32.f32 %v134
    %v151 = vcvt.s32.f32 %v135
    %v152 = vcvt.s32.f32 %v136
    %v153 = vcvt.s32.f32 %v137
    %v154 = vcvt.s32.f32 %v138
    %v155 = vcvt.s32.f32 %v139
    %v156 = vcvt.s32.f32 %v140
    %v157 = vcvt.s32.f32 %v141
    %v158 = vcvt.s32.f32 %v142
    %v159 = vcvt.s32.f32 %v143
    %v160 = vcvt.s32.f32 %v144
    %v161 = vcvt.s32.f32 %v145
    %v162 = vcvt.s32.f32 %v146
    %v163 = vcvt.s32.f32 %v147
    %v164 = vcvt.s32.f32 %v148
    %v165 = vcvt.s32.f32 %v149
    %vm166 = vcmask 130048
    %v168 = vsel %vm166, %v150, 0
    %v171 = vsel %vm166, %v151, 0
    %v174 = vsel %vm166, %v152, 0
    %v177 = vsel %vm166, %v153, 0
    %v180 = vsel %vm166, %v154, 0
    %v183 = vsel %vm166, %v155, 0
    %v186 = vsel %vm166, %v156, 0
    %v189 = vsel %vm166, %v157, 0
    %v192 = vsel %vm166, %v158, 0
    %v195 = vsel %vm166, %v159, 0
    %v198 = vsel %vm166, %v160, 0
    %v201 = vsel %vm166, %v161, 0
    %v204 = vsel %vm166, %v162, 0
    %v207 = vsel %vm166, %v163, 0
    %v210 = vsel %vm166, %v164, 0
    %v213 = vsel %vm166, %v165, 0
    %215 = vmatpush.msra.mxu0 0.0
    %216 = vmatpush.msra.mxu0 0.0
    %217 = vmatpush.msra.mxu0 0.0
    %218 = vmatpush.msra.mxu0 0.0
    %219 = vmatpush.msra.mxu0 0.0
    %220 = vmatpush.msra.mxu0 0.0
    %221 = vmatpush.msra.mxu0 0.0
    %222 = vmatpush.msra.mxu0 0.0
    %223 = vmatpush.msra.mxu0 0.0
    %224 = vmatpush.msra.mxu0 0.0
    %225 = vmatpush.msra.mxu0 0.0
    %226 = vmatpush.msra.mxu0 0.0
    %227 = vmatpush.msra.mxu0 0.0
    %228 = vmatpush.msra.mxu0 0.0
    %229 = vmatpush.msra.mxu0 %v43
    %230 = vmatpush.msra.mxu0 %v42
    %231 = vmatmul.f32.gmra.mxu0 %v168
    %v232 = vpop.f32.mrf.mxu0
    %v233 = vadd.f32 0.0, %v232
    %234 = vmatmul.f32.gmra.mxu0 %v171
    %v235 = vpop.f32.mrf.mxu0
    %v236 = vadd.f32 0.0, %v235
    %237 = vmatmul.f32.gmra.mxu0 %v174
    %v238 = vpop.f32.mrf.mxu0
    %v239 = vadd.f32 0.0, %v238
    %240 = vmatmul.f32.gmra.mxu0 %v177
    %v241 = vpop.f32.mrf.mxu0
    %v242 = vadd.f32 0.0, %v241
    %243 = vmatmul.f32.gmra.mxu0 %v180
    %v244 = vpop.f32.mrf.mxu0
    %v245 = vadd.f32 0.0, %v244
    %246 = vmatmul.f32.gmra.mxu0 %v183
    %v247 = vpop.f32.mrf.mxu0
    %v248 = vadd.f32 0.0, %v247
    %249 = vmatmul.f32.gmra.mxu0 %v186
    %v250 = vpop.f32.mrf.mxu0
    %v251 = vadd.f32 0.0, %v250
    %252 = vmatmul.f32.gmra.mxu0 %v189
    %v253 = vpop.f32.mrf.mxu0
    %v254 = vadd.f32 0.0, %v253
    %255 = vmatmul.f32.gmra.mxu0 %v192
    %v256 = vpop.f32.mrf.mxu0
    %v257 = vadd.f32 0.0, %v256
    %258 = vmatmul.f32.gmra.mxu0 %v195
    %v259 = vpop.f32.mrf.mxu0
    %v260 = vadd.f32 0.0, %v259
    %261 = vmatmul.f32.gmra.mxu0 %v198
    %v262 = vpop.f32.mrf.mxu0
    %v263 = vadd.f32 0.0, %v262
    %264 = vmatmul.f32.gmra.mxu0 %v201
    %v265 = vpop.f32.mrf.mxu0
    %v266 = vadd.f32 0.0, %v265
    %267 = vmatmul.f32.gmra.mxu0 %v204
    %v268 = vpop.f32.mrf.mxu0
    %v269 = vadd.f32 0.0, %v268
    %270 = vmatmul.f32.gmra.mxu0 %v207
    %v271 = vpop.f32.mrf.mxu0
    %v272 = vadd.f32 0.0, %v271
    %273 = vmatmul.f32.gmra.mxu0 %v210
    %v274 = vpop.f32.mrf.mxu0
    %v275 = vadd.f32 0.0, %v274
    %276 = vmatmul.f32.gmra.mxu0 %v213
    %v277 = vpop.f32.mrf.mxu0
    %v278 = vadd.f32 0.0, %v277
    %279 = vdwg.mxu0
    %v280 = vld [vmem:[#allocation2] sm:$0xff]
    %v281 = vld [vmem:[#allocation2 + $0x8] sm:$0xff]
    %v282 = vld [vmem:[#allocation2 + $0x10] sm:$0xff]
    %v283 = vld [vmem:[#allocation2 + $0x18] sm:$0xff]
    %s284 = scalar_lea.vmem [#allocation2], 32
    %v285 = vld [vmem:[%s284] sm:$0xff]
    %v286 = vld [vmem:[%s284 + $0x8] sm:$0xff]
    %v287 = vld [vmem:[%s284 + $0x10] sm:$0xff]
    %v288 = vld [vmem:[%s284 + $0x18] sm:$0xff]
    %vm289 = vcmask 261120
    %v291 = vsel %vm289, %v257, 0
    %v294 = vsel %vm289, %v260, 0
    %v297 = vsel %vm289, %v263, 0
    %v300 = vsel %vm289, %v266, 0
    %v303 = vsel %vm289, %v269, 0
    %v306 = vsel %vm289, %v272, 0
    %v309 = vsel %vm289, %v275, 0
    %v312 = vsel %vm289, %v278, 0
    %314 = vmatpush.msra.mxu0 0.0
    %315 = vmatpush.msra.mxu0 0.0
    %316 = vmatpush.msra.mxu0 0.0
    %317 = vmatpush.msra.mxu0 0.0
    %318 = vmatpush.msra.mxu0 0.0
    %319 = vmatpush.msra.mxu0 0.0
    %320 = vmatpush.msra.mxu0 0.0
    %321 = vmatpush.msra.mxu0 0.0
    %322 = vmatpush.msra.mxu0 0.0
    %323 = vmatpush.msra.mxu0 0.0
    %324 = vmatpush.msra.mxu0 0.0
    %325 = vmatpush.msra.mxu0 0.0
    %326 = vmatpush.msra.mxu0 %v288
    %327 = vmatpush.msra.mxu0 %v287
    %328 = vmatpush.msra.mxu0 %v286
    %329 = vmatpush.msra.mxu0 %v285
    %330 = vmatmul.f32.gmra.mxu0 %v291
    %v331 = vpop.f32.mrf.mxu0
    %v332 = vadd.f32 0.0, %v331
    %333 = vmatmul.f32.gmra.mxu0 %v294
    %v334 = vpop.f32.mrf.mxu0
    %v335 = vadd.f32 0.0, %v334
    %336 = vmatmul.f32.gmra.mxu0 %v297
    %v337 = vpop.f32.mrf.mxu0
    %v338 = vadd.f32 0.0, %v337
    %339 = vmatmul.f32.gmra.mxu0 %v300
    %v340 = vpop.f32.mrf.mxu0
    %v341 = vadd.f32 0.0, %v340
    %342 = vmatmul.f32.gmra.mxu0 %v303
    %v343 = vpop.f32.mrf.mxu0
    %v344 = vadd.f32 0.0, %v343
    %345 = vmatmul.f32.gmra.mxu0 %v306
    %v346 = vpop.f32.mrf.mxu0
    %v347 = vadd.f32 0.0, %v346
    %348 = vmatmul.f32.gmra.mxu0 %v309
    %v349 = vpop.f32.mrf.mxu0
    %v350 = vadd.f32 0.0, %v349
    %351 = vmatmul.f32.gmra.mxu0 %v312
    %v352 = vpop.f32.mrf.mxu0
    %v353 = vadd.f32 0.0, %v352
    %354 = vdwg.mxu0
    %v356 = vsel %vm289, %v233, 0
    %v359 = vsel %vm289, %v236, 0
    %v362 = vsel %vm289, %v239, 0
    %v365 = vsel %vm289, %v242, 0
    %v368 = vsel %vm289, %v245, 0
    %v371 = vsel %vm289, %v248, 0
    %v374 = vsel %vm289, %v251, 0
    %v377 = vsel %vm289, %v254, 0
    %379 = vmatpush.msra.mxu0 0.0
    %380 = vmatpush.msra.mxu0 0.0
    %381 = vmatpush.msra.mxu0 0.0
    %382 = vmatpush.msra.mxu0 0.0
    %383 = vmatpush.msra.mxu0 0.0
    %384 = vmatpush.msra.mxu0 0.0
    %385 = vmatpush.msra.mxu0 0.0
    %386 = vmatpush.msra.mxu0 0.0
    %387 = vmatpush.msra.mxu0 0.0
    %388 = vmatpush.msra.mxu0 0.0
    %389 = vmatpush.msra.mxu0 0.0
    %390 = vmatpush.msra.mxu0 0.0
    %391 = vmatpush.msra.mxu0 %v283
    %392 = vmatpush.msra.mxu0 %v282
    %393 = vmatpush.msra.mxu0 %v281
    %394 = vmatpush.msra.mxu0 %v280
    %395 = vmatmul.f32.gmra.mxu0 %v356
    %v396 = vpop.f32.mrf.mxu0
    %v397 = vadd.f32 %v332, %v396
    %398 = vmatmul.f32.gmra.mxu0 %v359
    %v399 = vpop.f32.mrf.mxu0
    %v400 = vadd.f32 %v335, %v399
    %401 = vmatmul.f32.gmra.mxu0 %v362
    %v402 = vpop.f32.mrf.mxu0
    %v403 = vadd.f32 %v338, %v402
    %404 = vmatmul.f32.gmra.mxu0 %v365
    %v405 = vpop.f32.mrf.mxu0
    %v406 = vadd.f32 %v341, %v405
    %407 = vmatmul.f32.gmra.mxu0 %v368
    %v408 = vpop.f32.mrf.mxu0
    %v409 = vadd.f32 %v344, %v408
    %410 = vmatmul.f32.gmra.mxu0 %v371
    %v411 = vpop.f32.mrf.mxu0
    %v412 = vadd.f32 %v347, %v411
    %413 = vmatmul.f32.gmra.mxu0 %v374
    %v414 = vpop.f32.mrf.mxu0
    %v415 = vadd.f32 %v350, %v414
    %416 = vmatmul.f32.gmra.mxu0 %v377
    %v417 = vpop.f32.mrf.mxu0
    %v418 = vadd.f32 %v353, %v417
    %419 = vdwg.mxu0
    %s420 = scalar_lea.vmem [#allocation2], 64
    %v421 = vld [vmem:[%s420] sm:$0xff]
    %v422 = vld [vmem:[%s420 + $0x8] sm:$0xff]
    %v423 = vld [vmem:[%s420 + $0x10] sm:$0xff]
    %v424 = vld [vmem:[%s420 + $0x18] sm:$0xff]
    %v426 = vsel %vm289, %v44, 0
    %v429 = vsel %vm289, %v45, 0
    %v432 = vsel %vm289, %v46, 0
    %v435 = vsel %vm289, %v47, 0
    %v438 = vsel %vm289, %v48, 0
    %v441 = vsel %vm289, %v49, 0
    %v444 = vsel %vm289, %v50, 0
    %v447 = vsel %vm289, %v51, 0
    %449 = vmatpush.msra.mxu0 0.0
    %450 = vmatpush.msra.mxu0 0.0
    %451 = vmatpush.msra.mxu0 0.0
    %452 = vmatpush.msra.mxu0 0.0
    %453 = vmatpush.msra.mxu0 0.0
    %454 = vmatpush.msra.mxu0 0.0
    %455 = vmatpush.msra.mxu0 0.0
    %456 = vmatpush.msra.mxu0 0.0
    %457 = vmatpush.msra.mxu0 0.0
    %458 = vmatpush.msra.mxu0 0.0
    %459 = vmatpush.msra.mxu0 0.0
    %460 = vmatpush.msra.mxu0 0.0
    %461 = vmatpush.msra.mxu0 %v424
    %462 = vmatpush.msra.mxu0 %v423
    %463 = vmatpush.msra.mxu0 %v422
    %464 = vmatpush.msra.mxu0 %v421
    %465 = vmatmul.f32.gmra.mxu0 %v426
    %v466 = vpop.f32.mrf.mxu0
    %v467 = vadd.f32 0.0, %v466
    %468 = vmatmul.f32.gmra.mxu0 %v429
    %v469 = vpop.f32.mrf.mxu0
    %v470 = vadd.f32 0.0, %v469
    %471 = vmatmul.f32.gmra.mxu0 %v432
    %v472 = vpop.f32.mrf.mxu0
    %v473 = vadd.f32 0.0, %v472
    %474 = vmatmul.f32.gmra.mxu0 %v435
    %v475 = vpop.f32.mrf.mxu0
    %v476 = vadd.f32 0.0, %v475
    %477 = vmatmul.f32.gmra.mxu0 %v438
    %v478 = vpop.f32.mrf.mxu0
    %v479 = vadd.f32 0.0, %v478
    %480 = vmatmul.f32.gmra.mxu0 %v441
    %v481 = vpop.f32.mrf.mxu0
    %v482 = vadd.f32 0.0, %v481
    %483 = vmatmul.f32.gmra.mxu0 %v444
    %v484 = vpop.f32.mrf.mxu0
    %v485 = vadd.f32 0.0, %v484
    %486 = vmatmul.f32.gmra.mxu0 %v447
    %v487 = vpop.f32.mrf.mxu0
    %v488 = vadd.f32 0.0, %v487
    %489 = vdwg.mxu0
    %v490 = vadd.f32 %v397, %v467
    %v491 = vadd.f32 %v400, %v470
    %v492 = vadd.f32 %v403, %v473
    %v493 = vadd.f32 %v406, %v476
    %v494 = vadd.f32 %v409, %v479
    %v495 = vadd.f32 %v412, %v482
    %v496 = vadd.f32 %v415, %v485
    %v497 = vadd.f32 %v418, %v488
    %v498 = vld [vmem:[%s5] sm:$0x1]
    %s499 = scalar_lea.vmem [#allocation2], 96
    %v500 = vld [vmem:[%s499] sm:$0xff]
    %v501 = vld [vmem:[%s499 + $0x8] sm:$0xff]
    %v502 = vld [vmem:[%s499 + $0x10] sm:$0xff]
    %v503 = vld [vmem:[%s499 + $0x18] sm:$0xff]
    %v504 = vld [vmem:[%s5 + $0x1] sm:$0x1]
    %s505 = scalar_lea.vmem [#allocation2], 128
    %v506 = vld [vmem:[%s505] sm:$0xff]
    %v507 = vld [vmem:[%s505 + $0x8] sm:$0xff]
    %v508 = vld [vmem:[%s505 + $0x10] sm:$0xff]
    %v509 = vld [vmem:[%s505 + $0x18] sm:$0xff]
    %v510 = vld [vmem:[%s5 + $0x2] sm:$0x1]
    %v511 = vld [vmem:[%s5 + $0x3] sm:$0x1]
    %v512 = vld [vmem:[%s5 + $0x4] sm:$0x1]
    %v513 = vperm.slane %v498, 0
    %v514 = vadd.f32 %v490, %v513
    %v515 = vadd.f32 %v491, %v513
    %v516 = vadd.f32 %v492, %v513
    %v517 = vadd.f32 %v493, %v513
    %v518 = vadd.f32 %v494, %v513
    %v519 = vadd.f32 %v495, %v513
    %v520 = vadd.f32 %v496, %v513
    %v521 = vadd.f32 %v497, %v513
    %v522 = vmax.f32 %v514, 0.0
    %v523 = vmax.f32 %v515, 0.0
    %v524 = vmax.f32 %v516, 0.0
    %v525 = vmax.f32 %v517, 0.0
    %v526 = vmax.f32 %v518, 0.0
    %v527 = vmax.f32 %v519, 0.0
    %v528 = vmax.f32 %v520, 0.0
    %v529 = vmax.f32 %v521, 0.0
    %v530 = vperm.slane %v504, 0
    %v532 = vsel %vm289, %v522, 0
    %v535 = vsel %vm289, %v523, 0
    %v538 = vsel %vm289, %v524, 0
    %v541 = vsel %vm289, %v525, 0
    %v544 = vsel %vm289, %v526, 0
    %v547 = vsel %vm289, %v527, 0
    %v550 = vsel %vm289, %v528, 0
    %v553 = vsel %vm289, %v529, 0
    %555 = vmatpush.msra.mxu0 0.0
    %556 = vmatpush.msra.mxu0 0.0
    %557 = vmatpush.msra.mxu0 0.0
    %558 = vmatpush.msra.mxu0 0.0
    %559 = vmatpush.msra.mxu0 0.0
    %560 = vmatpush.msra.mxu0 0.0
    %561 = vmatpush.msra.mxu0 0.0
    %562 = vmatpush.msra.mxu0 0.0
    %563 = vmatpush.msra.mxu0 0.0
    %564 = vmatpush.msra.mxu0 0.0
    %565 = vmatpush.msra.mxu0 0.0
    %566 = vmatpush.msra.mxu0 0.0
    %567 = vmatpush.msra.mxu0 %v503
    %568 = vmatpush.msra.mxu0 %v502
    %569 = vmatpush.msra.mxu0 %v501
    %570 = vmatpush.msra.mxu0 %v500
    %571 = vmatmul.f32.gmra.mxu0 %v532
    %v572 = vpop.f32.mrf.mxu0
    %v573 = vadd.f32 %v530, %v572
    %574 = vmatmul.f32.gmra.mxu0 %v535
    %v575 = vpop.f32.mrf.mxu0
    %v576 = vadd.f32 %v530, %v575
    %577 = vmatmul.f32.gmra.mxu0 %v538
    %v578 = vpop.f32.mrf.mxu0
    %v579 = vadd.f32 %v530, %v578
    %580 = vmatmul.f32.gmra.mxu0 %v541
    %v581 = vpop.f32.mrf.mxu0
    %v582 = vadd.f32 %v530, %v581
    %583 = vmatmul.f32.gmra.mxu0 %v544
    %v584 = vpop.f32.mrf.mxu0
    %v585 = vadd.f32 %v530, %v584
    %586 = vmatmul.f32.gmra.mxu0 %v547
    %v587 = vpop.f32.mrf.mxu0
    %v588 = vadd.f32 %v530, %v587
    %589 = vmatmul.f32.gmra.mxu0 %v550
    %v590 = vpop.f32.mrf.mxu0
    %v591 = vadd.f32 %v530, %v590
    %592 = vmatmul.f32.gmra.mxu0 %v553
    %v593 = vpop.f32.mrf.mxu0
    %v594 = vadd.f32 %v530, %v593
    %595 = vdwg.mxu0
    %v596 = vmax.f32 %v573, 0.0
    %v597 = vmax.f32 %v576, 0.0
    %v598 = vmax.f32 %v579, 0.0
    %v599 = vmax.f32 %v582, 0.0
    %v600 = vmax.f32 %v585, 0.0
    %v601 = vmax.f32 %v588, 0.0
    %v602 = vmax.f32 %v591, 0.0
    %v603 = vmax.f32 %v594, 0.0
    %v604 = vperm.slane %v510, 0
    %v606 = vsel %vm289, %v596, 0
    %v609 = vsel %vm289, %v597, 0
    %v612 = vsel %vm289, %v598, 0
    %v615 = vsel %vm289, %v599, 0
    %v618 = vsel %vm289, %v600, 0
    %v621 = vsel %vm289, %v601, 0
    %v624 = vsel %vm289, %v602, 0
    %v627 = vsel %vm289, %v603, 0
    %629 = vmatpush.msra.mxu0 0.0
    %630 = vmatpush.msra.mxu0 0.0
    %631 = vmatpush.msra.mxu0 0.0
    %632 = vmatpush.msra.mxu0 0.0
    %633 = vmatpush.msra.mxu0 0.0
    %634 = vmatpush.msra.mxu0 0.0
    %635 = vmatpush.msra.mxu0 0.0
    %636 = vmatpush.msra.mxu0 0.0
    %637 = vmatpush.msra.mxu0 0.0
    %638 = vmatpush.msra.mxu0 0.0
    %639 = vmatpush.msra.mxu0 0.0
    %640 = vmatpush.msra.mxu0 0.0
    %641 = vmatpush.msra.mxu0 %v509
    %642 = vmatpush.msra.mxu0 %v508
    %643 = vmatpush.msra.mxu0 %v507
    %644 = vmatpush.msra.mxu0 %v506
    %645 = vmatmul.f32.gmra.mxu0 %v606
    %v646 = vpop.f32.mrf.mxu0
    %v647 = vadd.f32 %v604, %v646
    %648 = vmatmul.f32.gmra.mxu0 %v609
    %v649 = vpop.f32.mrf.mxu0
    %v650 = vadd.f32 %v604, %v649
    %651 = vmatmul.f32.gmra.mxu0 %v612
    %v652 = vpop.f32.mrf.mxu0
    %v653 = vadd.f32 %v604, %v652
    %654 = vmatmul.f32.gmra.mxu0 %v615
    %v655 = vpop.f32.mrf.mxu0
    %v656 = vadd.f32 %v604, %v655
    %657 = vmatmul.f32.gmra.mxu0 %v618
    %v658 = vpop.f32.mrf.mxu0
    %v659 = vadd.f32 %v604, %v658
    %660 = vmatmul.f32.gmra.mxu0 %v621
    %v661 = vpop.f32.mrf.mxu0
    %v662 = vadd.f32 %v604, %v661
    %663 = vmatmul.f32.gmra.mxu0 %v624
    %v664 = vpop.f32.mrf.mxu0
    %v665 = vadd.f32 %v604, %v664
    %666 = vmatmul.f32.gmra.mxu0 %v627
    %v667 = vpop.f32.mrf.mxu0
    %v668 = vadd.f32 %v604, %v667
    %669 = vdwg.mxu0
    %v670 = vsel %vm289, %v647, 0.0
    %671 = vadd.xlane.f32.xlu0 %v670
    %v672 = vpop.xlane.xlu0 %671
    %v673 = vsel %vm289, %v650, 0.0
    %674 = vadd.xlane.f32.xlu0 %v673
    %v675 = vpop.xlane.xlu0 %674
    %v676 = vsel %vm289, %v653, 0.0
    %677 = vadd.xlane.f32.xlu0 %v676
    %v678 = vpop.xlane.xlu0 %677
    %v679 = vsel %vm289, %v656, 0.0
    %680 = vadd.xlane.f32.xlu0 %v679
    %v681 = vpop.xlane.xlu0 %680
    %v682 = vsel %vm289, %v659, 0.0
    %683 = vadd.xlane.f32.xlu0 %v682
    %v684 = vpop.xlane.xlu0 %683
    %v685 = vsel %vm289, %v662, 0.0
    %686 = vadd.xlane.f32.xlu0 %v685
    %v687 = vpop.xlane.xlu0 %686
    %v688 = vsel %vm289, %v665, 0.0
    %689 = vadd.xlane.f32.xlu0 %v688
    %v690 = vpop.xlane.xlu0 %689
    %v691 = vsel %vm289, %v668, 0.0
    %692 = vadd.xlane.f32.xlu0 %v691
    %v693 = vpop.xlane.xlu0 %692
    %v694 = vrcp.pop 32.0
    %v695 = vmul.f32 32.0, %v694
    %v696 = vsub.f32 1.0, %v695
    %v697 = vmul.f32 %v694, %v696
    %v698 = vadd.f32 %v694, %v697
    %vm699 = vweird.f32 %v694
    %v700 = vsel %vm699, %v694, %v698
    %v701 = vmul.f32 %v672, %v700
    %v702 = vmul.f32 %v675, %v700
    %v703 = vmul.f32 %v678, %v700
    %v704 = vmul.f32 %v681, %v700
    %v705 = vmul.f32 %v684, %v700
    %v706 = vmul.f32 %v687, %v700
    %v707 = vmul.f32 %v690, %v700
    %v708 = vmul.f32 %v693, %v700
    %v709 = vsub.f32 %v647, %v701
    %v710 = vsub.f32 %v650, %v702
    %v711 = vsub.f32 %v653, %v703
    %v712 = vsub.f32 %v656, %v704
    %v713 = vsub.f32 %v659, %v705
    %v714 = vsub.f32 %v662, %v706
    %v715 = vsub.f32 %v665, %v707
    %v716 = vsub.f32 %v668, %v708
    %v717 = vmul.f32 %v709, %v709
    %v718 = vmul.f32 %v710, %v710
    %v719 = vmul.f32 %v711, %v711
    %v720 = vmul.f32 %v712, %v712
    %v721 = vmul.f32 %v713, %v713
    %v722 = vmul.f32 %v714, %v714
    %v723 = vmul.f32 %v715, %v715
    %v724 = vmul.f32 %v716, %v716
    %v725 = vsel %vm289, %v717, 0.0
    %726 = vadd.xlane.f32.xlu0 %v725
    %v727 = vpop.xlane.xlu0 %726
    %v728 = vsel %vm289, %v718, 0.0
    %729 = vadd.xlane.f32.xlu0 %v728
    %v730 = vpop.xlane.xlu0 %729
    %v731 = vsel %vm289, %v719, 0.0
    %732 = vadd.xlane.f32.xlu0 %v731
    %v733 = vpop.xlane.xlu0 %732
    %v734 = vsel %vm289, %v720, 0.0
    %735 = vadd.xlane.f32.xlu0 %v734
    %v736 = vpop.xlane.xlu0 %735
    %v737 = vsel %vm289, %v721, 0.0
    %738 = vadd.xlane.f32.xlu0 %v737
    %v739 = vpop.xlane.xlu0 %738
    %v740 = vsel %vm289, %v722, 0.0
    %741 = vadd.xlane.f32.xlu0 %v740
    %v742 = vpop.xlane.xlu0 %741
    %v743 = vsel %vm289, %v723, 0.0
    %744 = vadd.xlane.f32.xlu0 %v743
    %v745 = vpop.xlane.xlu0 %744
    %v746 = vsel %vm289, %v724, 0.0
    %747 = vadd.xlane.f32.xlu0 %v746
    %v748 = vpop.xlane.xlu0 %747
    %v749 = vmul.f32 %v727, %v700
    %v750 = vmul.f32 %v730, %v700
    %v751 = vmul.f32 %v733, %v700
    %v752 = vmul.f32 %v736, %v700
    %v753 = vmul.f32 %v739, %v700
    %v754 = vmul.f32 %v742, %v700
    %v755 = vmul.f32 %v745, %v700
    %v756 = vmul.f32 %v748, %v700
    %v757 = vadd.f32 %v749, 1e-05
    %v758 = vadd.f32 %v750, 1e-05
    %v759 = vadd.f32 %v751, 1e-05
    %v760 = vadd.f32 %v752, 1e-05
    %v761 = vadd.f32 %v753, 1e-05
    %v762 = vadd.f32 %v754, 1e-05
    %v763 = vadd.f32 %v755, 1e-05
    %v764 = vadd.f32 %v756, 1e-05
    %v765 = vrsqrt.pop %v757
    %v766 = vmul.f32 %v765, %v757
    %v767 = vmul.f32 %v766, %v765
    %v768 = vmul.f32 0.5, %v767
    %v769 = vsub.f32 1.5, %v768
    %v770 = vmul.f32 %v765, %v769
    %vm771 = vweird.f32 %v757
    %vm772 = vweird.f32 %v765
    %vm773 = vmor %vm771, %vm772
    %v774 = vsel %vm773, %v765, %v770
    %v775 = vrsqrt.pop %v758
    %v776 = vmul.f32 %v775, %v758
    %v777 = vmul.f32 %v776, %v775
    %v778 = vmul.f32 0.5, %v777
    %v779 = vsub.f32 1.5, %v778
    %v780 = vmul.f32 %v775, %v779
    %vm781 = vweird.f32 %v758
    %vm782 = vweird.f32 %v775
    %vm783 = vmor %vm781, %vm782
    %v784 = vsel %vm783, %v775, %v780
    %v785 = vrsqrt.pop %v759
    %v786 = vmul.f32 %v785, %v759
    %v787 = vmul.f32 %v786, %v785
    %v788 = vmul.f32 0.5, %v787
    %v789 = vsub.f32 1.5, %v788
    %v790 = vmul.f32 %v785, %v789
    %vm791 = vweird.f32 %v759
    %vm792 = vweird.f32 %v785
    %vm793 = vmor %vm791, %vm792
    %v794 = vsel %vm793, %v785, %v790
    %v795 = vrsqrt.pop %v760
    %v796 = vmul.f32 %v795, %v760
    %v797 = vmul.f32 %v796, %v795
    %v798 = vmul.f32 0.5, %v797
    %v799 = vsub.f32 1.5, %v798
    %v800 = vmul.f32 %v795, %v799
    %vm801 = vweird.f32 %v760
    %vm802 = vweird.f32 %v795
    %vm803 = vmor %vm801, %vm802
    %v804 = vsel %vm803, %v795, %v800
    %v805 = vrsqrt.pop %v761
    %v806 = vmul.f32 %v805, %v761
    %v807 = vmul.f32 %v806, %v805
    %v808 = vmul.f32 0.5, %v807
    %v809 = vsub.f32 1.5, %v808
    %v810 = vmul.f32 %v805, %v809
    %vm811 = vweird.f32 %v761
    %vm812 = vweird.f32 %v805
    %vm813 = vmor %vm811, %vm812
    %v814 = vsel %vm813, %v805, %v810
    %v815 = vrsqrt.pop %v762
    %v816 = vmul.f32 %v815, %v762
    %v817 = vmul.f32 %v816, %v815
    %v818 = vmul.f32 0.5, %v817
    %v819 = vsub.f32 1.5, %v818
    %v820 = vmul.f32 %v815, %v819
    %vm821 = vweird.f32 %v762
    %vm822 = vweird.f32 %v815
    %vm823 = vmor %vm821, %vm822
    %v824 = vsel %vm823, %v815, %v820
    %v825 = vrsqrt.pop %v763
    %v826 = vmul.f32 %v825, %v763
    %v827 = vmul.f32 %v826, %v825
    %v828 = vmul.f32 0.5, %v827
    %v829 = vsub.f32 1.5, %v828
    %v830 = vmul.f32 %v825, %v829
    %vm831 = vweird.f32 %v763
    %vm832 = vweird.f32 %v825
    %vm833 = vmor %vm831, %vm832
    %v834 = vsel %vm833, %v825, %v830
    %v835 = vrsqrt.pop %v764
    %v836 = vmul.f32 %v835, %v764
    %v837 = vmul.f32 %v836, %v835
    %v838 = vmul.f32 0.5, %v837
    %v839 = vsub.f32 1.5, %v838
    %v840 = vmul.f32 %v835, %v839
    %vm841 = vweird.f32 %v764
    %vm842 = vweird.f32 %v835
    %vm843 = vmor %vm841, %vm842
    %v844 = vsel %vm843, %v835, %v840
    %v845 = vmul.f32 %v709, %v774
    %v846 = vmul.f32 %v710, %v784
    %v847 = vmul.f32 %v711, %v794
    %v848 = vmul.f32 %v712, %v804
    %v849 = vmul.f32 %v713, %v814
    %v850 = vmul.f32 %v714, %v824
    %v851 = vmul.f32 %v715, %v834
    %v852 = vmul.f32 %v716, %v844
    %v853 = vperm.slane %v511, 0
    %v854 = vmul.f32 %v845, %v853
    %v855 = vmul.f32 %v846, %v853
    %v856 = vmul.f32 %v847, %v853
    %v857 = vmul.f32 %v848, %v853
    %v858 = vmul.f32 %v849, %v853
    %v859 = vmul.f32 %v850, %v853
    %v860 = vmul.f32 %v851, %v853
    %v861 = vmul.f32 %v852, %v853
    %v862 = vperm.slane %v512, 0
    %v863 = vadd.f32 %v854, %v862
    %v864 = vadd.f32 %v855, %v862
    %v865 = vadd.f32 %v856, %v862
    %v866 = vadd.f32 %v857, %v862
    %v867 = vadd.f32 %v858, %v862
    %v868 = vadd.f32 %v859, %v862
    %v869 = vadd.f32 %v860, %v862
    %v870 = vadd.f32 %v861, %v862
    %871 = vst.msk [vmem:[%s7] sm:$0xff] %vm289, %v863
    %872 = vst.msk [vmem:[%s7 + $0x8] sm:$0xff] %vm289, %v864
    %873 = vst.msk [vmem:[%s7 + $0x10] sm:$0xff] %vm289, %v865
    %874 = vst.msk [vmem:[%s7 + $0x18] sm:$0xff] %vm289, %v866
    %875 = vst.msk [vmem:[%s7 + $0x20] sm:$0xff] %vm289, %v867
    %876 = vst.msk [vmem:[%s7 + $0x28] sm:$0xff] %vm289, %v868
    %877 = vst.msk [vmem:[%s7 + $0x30] sm:$0xff] %vm289, %v869
    %878 = vst.msk [vmem:[%s7 + $0x38] sm:$0xff] %vm289, %v870
    %v879 = vlaneseq
    %v880 = vshrl.u32 %v879, 7
    %v881 = vadd.s32 %v880, 8
    %v882 = vld [vmem:[%s1] sm:$0x1]
    %v883 = vperm.slane %v882, 0
    %vm884 = vcmp.eq.s32.totalorder %v880, %v883
    %vm885 = vcmp.eq.s32.totalorder %v881, %v883
    %v886 = vsel %vm884, 1, 0
    %v887 = vsel %vm885, 1, 0
    %v888 = vcvt.s32.f32 %v886
    %v889 = vcvt.s32.f32 %v887
    %vm890 = vcmask 523264
    %v892 = vsel %vm890, %v888, 0
    %v895 = vsel %vm890, %v889, 0
    %897 = vmatpush.msra.mxu0 0.0
    %898 = vmatpush.msra.mxu0 0.0
    %899 = vmatpush.msra.mxu0 0.0
    %900 = vmatpush.msra.mxu0 0.0
    %901 = vmatpush.msra.mxu0 0.0
    %902 = vmatpush.msra.mxu0 0.0
    %903 = vmatpush.msra.mxu0 0.0
    %904 = vmatpush.msra.mxu0 0.0
    %905 = vmatpush.msra.mxu0 %v870
    %906 = vmatpush.msra.mxu0 %v869
    %907 = vmatpush.msra.mxu0 %v868
    %908 = vmatpush.msra.mxu0 %v867
    %909 = vmatpush.msra.mxu0 %v866
    %910 = vmatpush.msra.mxu0 %v865
    %911 = vmatpush.msra.mxu0 %v864
    %912 = vmatpush.msra.mxu0 %v863
    %913 = vmatmul.f32.gmra.mxu0 %v892
    %v914 = vpop.f32.mrf.mxu0
    %v915 = vadd.f32 0.0, %v914
    %916 = vmatmul.f32.gmra.mxu0 %v895
    %v917 = vpop.f32.mrf.mxu0
    %v918 = vadd.f32 0.0, %v917
    %919 = vdwg.mxu0
    %s920 = scalar_lea.vmem [#allocation2], 160
    %v921 = vld [vmem:[%s920] sm:$0xff]
    %v922 = vld [vmem:[%s920 + $0x8] sm:$0xff]
    %v923 = vld [vmem:[%s920 + $0x10] sm:$0xff]
    %v924 = vld [vmem:[%s920 + $0x18] sm:$0xff]
    %s925 = scalar_lea.vmem [#allocation2], 192
    %v926 = vld [vmem:[%s925] sm:$0xff]
    %v927 = vld [vmem:[%s925 + $0x8] sm:$0xff]
    %v928 = vld [vmem:[%s925 + $0x10] sm:$0xff]
    %v929 = vld [vmem:[%s925 + $0x18] sm:$0xff]
    %v931 = vsel %vm289, %v915, 0
    %v934 = vsel %vm289, %v918, 0
    %936 = vmatpush.msra.mxu0 0.0
    %937 = vmatpush.msra.mxu0 0.0
    %938 = vmatpush.msra.mxu0 0.0
    %939 = vmatpush.msra.mxu0 0.0
    %940 = vmatpush.msra.mxu0 0.0
    %941 = vmatpush.msra.mxu0 0.0
    %942 = vmatpush.msra.mxu0 0.0
    %943 = vmatpush.msra.mxu0 0.0
    %944 = vmatpush.msra.mxu0 0.0
    %945 = vmatpush.msra.mxu0 0.0
    %946 = vmatpush.msra.mxu0 0.0
    %947 = vmatpush.msra.mxu0 0.0
    %948 = vmatpush.msra.mxu0 %v929
    %949 = vmatpush.msra.mxu0 %v928
    %950 = vmatpush.msra.mxu0 %v927
    %951 = vmatpush.msra.mxu0 %v926
    %952 = vmatmul.f32.gmra.mxu0 %v931
    %v953 = vpop.f32.mrf.mxu0
    %v954 = vadd.f32 0.0, %v953
    %955 = vmatmul.f32.gmra.mxu0 %v934
    %v956 = vpop.f32.mrf.mxu0
    %v957 = vadd.f32 0.0, %v956
    %958 = vdwg.mxu0
    %v960 = vsel %vm289, %v42, 0
    %v963 = vsel %vm289, %v43, 0
    %965 = vmatpush.msra.mxu0 0.0
    %966 = vmatpush.msra.mxu0 0.0
    %967 = vmatpush.msra.mxu0 0.0
    %968 = vmatpush.msra.mxu0 0.0
    %969 = vmatpush.msra.mxu0 0.0
    %970 = vmatpush.msra.mxu0 0.0
    %971 = vmatpush.msra.mxu0 0.0
    %972 = vmatpush.msra.mxu0 0.0
    %973 = vmatpush.msra.mxu0 0.0
    %974 = vmatpush.msra.mxu0 0.0
    %975 = vmatpush.msra.mxu0 0.0
    %976 = vmatpush.msra.mxu0 0.0
    %977 = vmatpush.msra.mxu0 %v924
    %978 = vmatpush.msra.mxu0 %v923
    %979 = vmatpush.msra.mxu0 %v922
    %980 = vmatpush.msra.mxu0 %v921
    %981 = vmatmul.f32.gmra.mxu0 %v960
    %v982 = vpop.f32.mrf.mxu0
    %v983 = vadd.f32 %v954, %v982
    %984 = vmatmul.f32.gmra.mxu0 %v963
    %v985 = vpop.f32.mrf.mxu0
    %v986 = vadd.f32 %v957, %v985
    %987 = vdwg.mxu0
    %v988 = vld [vmem:[%s5 + $0x5] sm:$0x1]
    %s989 = scalar_lea.vmem [#allocation2], 224
    %v990 = vld [vmem:[%s989] sm:$0xff]
    %v991 = vld [vmem:[%s989 + $0x8] sm:$0xff]
    %v992 = vld [vmem:[%s989 + $0x10] sm:$0xff]
    %v993 = vld [vmem:[%s989 + $0x18] sm:$0xff]
    %v994 = vld [vmem:[%s5 + $0x6] sm:$0x1]
    %s995 = scalar_lea.vmem [#allocation2], 256
    %v996 = vld [vmem:[%s995] sm:$0xff]
    %v997 = vld [vmem:[%s995 + $0x8] sm:$0xff]
    %v998 = vld [vmem:[%s995 + $0x10] sm:$0xff]
    %v999 = vld [vmem:[%s995 + $0x18] sm:$0xff]
    %v1000 = vld [vmem:[%s5 + $0x7] sm:$0x1]
    %v1001 = vld [vmem:[%s5 + $0x8] sm:$0x1]
    %v1002 = vld [vmem:[%s5 + $0x9] sm:$0x1]
    %v1003 = vperm.slane %v988, 0
    %v1004 = vadd.f32 %v983, %v1003
    %v1005 = vadd.f32 %v986, %v1003
    %v1006 = vmax.f32 %v1004, 0.0
    %v1007 = vmax.f32 %v1005, 0.0
    %v1008 = vperm.slane %v994, 0
    %v1010 = vsel %vm289, %v1006, 0
    %v1013 = vsel %vm289, %v1007, 0
    %1015 = vmatpush.msra.mxu0 0.0
    %1016 = vmatpush.msra.mxu0 0.0
    %1017 = vmatpush.msra.mxu0 0.0
    %1018 = vmatpush.msra.mxu0 0.0
    %1019 = vmatpush.msra.mxu0 0.0
    %1020 = vmatpush.msra.mxu0 0.0
    %1021 = vmatpush.msra.mxu0 0.0
    %1022 = vmatpush.msra.mxu0 0.0
    %1023 = vmatpush.msra.mxu0 0.0
    %1024 = vmatpush.msra.mxu0 0.0
    %1025 = vmatpush.msra.mxu0 0.0
    %1026 = vmatpush.msra.mxu0 0.0
    %1027 = vmatpush.msra.mxu0 %v993
    %1028 = vmatpush.msra.mxu0 %v992
    %1029 = vmatpush.msra.mxu0 %v991
    %1030 = vmatpush.msra.mxu0 %v990
    %1031 = vmatmul.f32.gmra.mxu0 %v1010
    %v1032 = vpop.f32.mrf.mxu0
    %v1033 = vadd.f32 %v1008, %v1032
    %1034 = vmatmul.f32.gmra.mxu0 %v1013
    %v1035 = vpop.f32.mrf.mxu0
    %v1036 = vadd.f32 %v1008, %v1035
    %1037 = vdwg.mxu0
    %v1038 = vmax.f32 %v1033, 0.0
    %v1039 = vmax.f32 %v1036, 0.0
    %v1040 = vperm.slane %v1000, 0
    %v1042 = vsel %vm289, %v1038, 0
    %v1045 = vsel %vm289, %v1039, 0
    %1047 = vmatpush.msra.mxu0 0.0
    %1048 = vmatpush.msra.mxu0 0.0
    %1049 = vmatpush.msra.mxu0 0.0
    %1050 = vmatpush.msra.mxu0 0.0
    %1051 = vmatpush.msra.mxu0 0.0
    %1052 = vmatpush.msra.mxu0 0.0
    %1053 = vmatpush.msra.mxu0 0.0
    %1054 = vmatpush.msra.mxu0 0.0
    %1055 = vmatpush.msra.mxu0 0.0
    %1056 = vmatpush.msra.mxu0 0.0
    %1057 = vmatpush.msra.mxu0 0.0
    %1058 = vmatpush.msra.mxu0 0.0
    %1059 = vmatpush.msra.mxu0 %v999
    %1060 = vmatpush.msra.mxu0 %v998
    %1061 = vmatpush.msra.mxu0 %v997
    %1062 = vmatpush.msra.mxu0 %v996
    %1063 = vmatmul.f32.gmra.mxu0 %v1042
    %v1064 = vpop.f32.mrf.mxu0
    %v1065 = vadd.f32 %v1040, %v1064
    %1066 = vmatmul.f32.gmra.mxu0 %v1045
    %v1067 = vpop.f32.mrf.mxu0
    %v1068 = vadd.f32 %v1040, %v1067
    %1069 = vdwg.mxu0
    %v1070 = vsel %vm289, %v1065, 0.0
    %1071 = vadd.xlane.f32.xlu0 %v1070
    %v1072 = vpop.xlane.xlu0 %1071
    %v1073 = vsel %vm289, %v1068, 0.0
    %1074 = vadd.xlane.f32.xlu0 %v1073
    %v1075 = vpop.xlane.xlu0 %1074
    %v1076 = vmul.f32 %v1072, %v700
    %v1077 = vmul.f32 %v1075, %v700
    %v1078 = vsub.f32 %v1065, %v1076
    %v1079 = vsub.f32 %v1068, %v1077
    %v1080 = vmul.f32 %v1078, %v1078
    %v1081 = vmul.f32 %v1079, %v1079
    %v1082 = vsel %vm289, %v1080, 0.0
    %1083 = vadd.xlane.f32.xlu0 %v1082
    %v1084 = vpop.xlane.xlu0 %1083
    %v1085 = vsel %vm289, %v1081, 0.0
    %1086 = vadd.xlane.f32.xlu0 %v1085
    %v1087 = vpop.xlane.xlu0 %1086
    %v1088 = vmul.f32 %v1084, %v700
    %v1089 = vmul.f32 %v1087, %v700
    %v1090 = vadd.f32 %v1088, 1e-05
    %v1091 = vadd.f32 %v1089, 1e-05
    %v1092 = vrsqrt.pop %v1090
    %v1093 = vmul.f32 %v1092, %v1090
    %v1094 = vmul.f32 %v1093, %v1092
    %v1095 = vmul.f32 0.5, %v1094
    %v1096 = vsub.f32 1.5, %v1095
    %v1097 = vmul.f32 %v1092, %v1096
    %vm1098 = vweird.f32 %v1090
    %vm1099 = vweird.f32 %v1092
    %vm1100 = vmor %vm1098, %vm1099
    %v1101 = vsel %vm1100, %v1092, %v1097
    %v1102 = vrsqrt.pop %v1091
    %v1103 = vmul.f32 %v1102, %v1091
    %v1104 = vmul.f32 %v1103, %v1102
    %v1105 = vmul.f32 0.5, %v1104
    %v1106 = vsub.f32 1.5, %v1105
    %v1107 = vmul.f32 %v1102, %v1106
    %vm1108 = vweird.f32 %v1091
    %vm1109 = vweird.f32 %v1102
    %vm1110 = vmor %vm1108, %vm1109
    %v1111 = vsel %vm1110, %v1102, %v1107
    %v1112 = vmul.f32 %v1078, %v1101
    %v1113 = vmul.f32 %v1079, %v1111
    %v1114 = vperm.slane %v1001, 0
    %v1115 = vmul.f32 %v1112, %v1114
    %v1116 = vmul.f32 %v1113, %v1114
    %v1117 = vperm.slane %v1002, 0
    %v1118 = vadd.f32 %v1115, %v1117
    %v1119 = vadd.f32 %v1116, %v1117
    %1120 = vst.msk [vmem:[#allocation5] sm:$0xff] %vm289, %v1118
    %1121 = vst.msk [vmem:[#allocation5 + $0x8] sm:$0xff] %vm289, %v1119
    // Predicated region
    $region30: #{message_passing_forward.1} parent=1 // pred_check
      _
    $region31: #{message_passing_forward.1} parent=1 // pred_check_branch
      %1123 = sbr.rel (0) target = $region33
    $region32: #{message_passing_forward.1} parent=1 // pred_region
      %1125 = vsyncadd [#allocation4], 0
      %s1126 = sshll.u32 [#allocation5], 4
      %s1127 = int_to_ptr.vmem [resolvable:$true] %s1126
      %s1128 = sshll.u32 %s6, 4
      %s1129 = int_to_ptr.hbm [resolvable:$true] %s1128
      %1134 = dma.vmem_to_hbm [thread:$0]  %s1127, 256, %s1129, [#allocation4], 128, 128, 8
    $region33: #{message_passing_forward.1} parent=1 // pred_fallthru
      _
    // Predicated region
    $region34: #{message_passing_forward.1} parent=1 // pred_check
      _
    $region35: #{message_passing_forward.1} parent=1 // pred_check_branch
      %1136 = sbr.rel (0) target = $region37
    $region36: #{message_passing_forward.1} parent=1 // pred_region
      _
    $region37: #{message_passing_forward.1} parent=1 // pred_fallthru
      _
    // Predicated region
    $region38: #{message_passing_forward.1} parent=1 // pred_check
      _
    $region39: #{message_passing_forward.1} parent=1 // pred_check_branch
      %1138 = sbr.rel (0) target = $region41
    $region40: #{message_passing_forward.1} parent=1 // pred_region
      %1140 = dma.done [#allocation4], 256
    $region41: #{message_passing_forward.1} parent=1 // pred_fallthru
      _
    // Predicated region
    $region42: #{message_passing_forward.1} parent=1 // pred_check
      _
    $region43: #{message_passing_forward.1} parent=1 // pred_check_branch
      %1142 = sbr.rel (0) target = $region45
    $region44: #{message_passing_forward.1} parent=1 // pred_region
      _
    $region45: #{message_passing_forward.1} parent=1 // pred_fallthru
      _
    %1143 = vsyncpa [#allocation3], 1
    %1144 = vsyncpa [#allocation4], 1

</llo_original>
